<compile_context>
chip_gen: v6e
topology: v6e:2x2x1
jax: 0.10.0
libtpu: 0.0.40
codegen_flags: <defaults>
</compile_context>

<pallas_src>
import functools

import jax
import jax.numpy as jnp
from jax import lax
from jax.experimental import pallas as pl
from jax.experimental.pallas import tpu as pltpu


NEG_SLOPE = 0.2


def _leaky(y):
    # LeakyReLU(0.2): valid because the slope is < 1.
    return jnp.maximum(y, NEG_SLOPE * y)


def _round_up(x, m):
    return ((x + m - 1) // m) * m


# ----------------------------------------------------------------------------
# Single fused kernel: conv1x1+LReLU -> conv2x2s2+BN+LReLU (x2) -> conv1x1
# ----------------------------------------------------------------------------
def _disc2_kernel(x_ref, w1_ref, b1_ref, w2_ref, s2_ref, w3_ref, s3_ref,
                  w4_ref, b4_ref, o_ref):
    """Whole Discriminator2 forward for one lane tile.

    Lane axis (last dim, length TM) = flattened (n, h4, w4) output positions.

    x_ref  : [16*Cin, TM]    space-to-depth(4); row = (g*4 + t)*Cin + c with
                             g = ph*2+pw (stage-3 tap), t = kh*2+kw (stage-2
                             tap).                                 compute dtype
    w1_ref : [16*ndf, 16*Cin] block-diag(16 x 1x1-conv weight)     compute dtype
    b1_ref : [16*ndf, 1]      conv1 bias, tiled x16                f32
    w2_ref : [4*ndf, 16*ndf]  block-diag(4 x BN-scaled conv2 taps) compute dtype
    s2_ref : [4*ndf, 1]       folded BN2 shift, tiled x4           f32
    w3_ref : [2*ndf, 4*ndf]   BN-scaled conv3 taps, concat on K    compute dtype
    s3_ref : [2*ndf, 1]       folded BN3 shift                     f32
    w4_ref : [2*ndf, 1]       final 1x1 conv weight (column)       f32
    b4_ref : [1, 1]           final bias (SMEM scalar)             f32
    o_ref  : [1, TM]
    """
    f32 = jnp.float32
    cdt = x_ref.dtype

    # Stage 1: 1x1 conv + bias + LeakyReLU for all 16 phases in ONE MXU launch.
    # x_ref is consumed by this single dot, so its live range is minimal.
    a1 = jnp.dot(w1_ref[...], x_ref[...], preferred_element_type=f32)
    a1 = _leaky(a1 + b1_ref[...]).astype(cdt)            # [16*ndf, TM]

    # Stage 2: 2x2 stride-2 conv (+ folded BN) + LeakyReLU, all 4 output
    # sub-positions at once (K = 16*ndf).
    a2 = jnp.dot(w2_ref[...], a1, preferred_element_type=f32)
    a2 = _leaky(a2 + s2_ref[...]).astype(cdt)             # [4*ndf, TM]

    # Stage 3: 2x2 stride-2 conv (+ folded BN) + LeakyReLU (K = 4*ndf).
    a3 = jnp.dot(w3_ref[...], a2, preferred_element_type=f32)
    a3 = _leaky(a3 + s3_ref[...])                         # [2*ndf, TM]  f32

    # Stage 4: 1x1 conv to ONE channel.  A single-output-row matmul wastes the
    # MXU, so do it on the VPU + a small sublane reduction instead.
    out = jnp.sum(a3 * w4_ref[...], axis=0, keepdims=True) + b4_ref[0, 0]
    o_ref[...] = out.astype(o_ref.dtype)


# ----------------------------------------------------------------------------
# Host-side folding helpers (tiny, run once on weights)
# ----------------------------------------------------------------------------
def fold_bn(gamma, beta, running_mean, running_var, eps=1e-5):
    scale = gamma / jnp.sqrt(running_var + eps)
    shift = beta - running_mean * scale
    return scale, shift


def _cat_taps(w_conv, scale):
    # [Cout, Cin, 2, 2] scaled per-Cout -> [Cout, 4*Cin], col = (kh*2+kw)*Cin+ci
    co, ci = w_conv.shape[:2]
    w = w_conv * scale[:, None, None, None]
    return jnp.transpose(w, (0, 2, 3, 1)).reshape(co, 4 * ci)


def _prep_operands(params, compute_dtype):
    f32 = jnp.float32
    ndf, in_ch = params["w1"].shape[:2]
    ndf2 = params["w3"].shape[0]

    w1 = params["w1"].reshape(ndf, in_ch).astype(f32)
    w1blk = jnp.kron(jnp.eye(16, dtype=f32), w1)           # [16*ndf, 16*Cin]
    b1 = jnp.tile(params["b1"].reshape(ndf, 1).astype(f32), (16, 1))

    sc2, sh2 = fold_bn(params["g2"], params["be2"], params["m2"], params["v2"])
    w2cat = _cat_taps(params["w2"].astype(f32), sc2.astype(f32))  # [ndf, 4ndf]
    w2blk = jnp.kron(jnp.eye(4, dtype=f32), w2cat)          # [4*ndf, 16*ndf]
    s2 = jnp.tile(sh2.reshape(ndf, 1).astype(f32), (4, 1))

    sc3, sh3 = fold_bn(params["g3"], params["be3"], params["m3"], params["v3"])
    w3cat = _cat_taps(params["w3"].astype(f32), sc3.astype(f32))  # [2ndf, 4ndf]
    s3 = sh3.reshape(ndf2, 1).astype(f32)

    w4 = params["w4"].reshape(1, ndf2).astype(f32).T        # [2*ndf, 1]
    b4 = params["b4"].reshape(1, 1).astype(f32)

    return dict(w1blk=w1blk.astype(compute_dtype), b1=b1,
                w2blk=w2blk.astype(compute_dtype), s2=s2,
                w3cat=w3cat.astype(compute_dtype), s3=s3,
                w4=w4, b4=b4)


# ----------------------------------------------------------------------------
# Forward pass
# ----------------------------------------------------------------------------
def discriminator2_forward(x_nchw, params, noise=0.0, noise_key=None, *,
                           compute_dtype=jnp.bfloat16, tm_max=2048):
    if noise != 0.0 and noise_key is not None:
        x_nchw = x_nchw + noise * jax.random.normal(noise_key, x_nchw.shape,
                                                    x_nchw.dtype)
    x = x_nchw.astype(jnp.float32)
    N, Cin, H, W = x.shape
    H4, W4 = H // 4, W // 4
    # Crop to the receptive field actually used (floor behaviour of the two
    # stride-2 valid convs); no-op when H, W are multiples of 4.
    x = x[:, :, : 4 * H4, : 4 * W4]
    M = N * H4 * W4

    # space-to-depth(4) with phase ordering (ph, pw, kh, kw) so each stage-2
    # group's 4 taps (and each stage-3 tap's group) are contiguous rows:
    #   row = ((ph*2 + pw)*4 + (kh*2 + kw)) * Cin + c,   lane = (n, h4, w4).
    xp = x.reshape(N, Cin, H4, 2, 2, W4, 2, 2)
    xp = jnp.transpose(xp, (3, 6, 4, 7, 1, 0, 2, 5))
    xp = xp.reshape(16 * Cin, M).astype(compute_dtype)

    ops = _prep_operands(params, compute_dtype)
    ndf = params["w1"].shape[0]
    ndf2 = params["w3"].shape[0]

    # Lane-axis tiling: big 128-aligned blocks (amortise per-step pipeline
    # overhead, unmasked stores) and >=2 grid steps whenever M allows so both
    # v7x TensorCores get work.  Full-extent single block for tiny inputs.
    tm_max = max(128, (tm_max // 128) * 128)
    if M <= 512:
        tm, Mp = M, M                      # full-extent block: always legal
    else:
        tm = min(tm_max, _round_up(pl.cdiv(M, 2), 128))
        Mp = _round_up(M, tm)
        if Mp != M:
            xp = jnp.pad(xp, ((0, 0), (0, Mp - M)))
    grid = (Mp // tm,)

    out = pl.pallas_call(
        _disc2_kernel,
        out_shape=jax.ShapeDtypeStruct((1, Mp), jnp.float32),
        grid_spec=pltpu.PrefetchScalarGridSpec(
            num_scalar_prefetch=0,
            grid=grid,
            in_specs=[
                pl.BlockSpec((16 * Cin, tm), lambda i: (0, i)),
                pl.BlockSpec((16 * ndf, 16 * Cin), lambda i: (0, 0)),
                pl.BlockSpec((16 * ndf, 1), lambda i: (0, 0)),
                pl.BlockSpec((4 * ndf, 16 * ndf), lambda i: (0, 0)),
                pl.BlockSpec((4 * ndf, 1), lambda i: (0, 0)),
                pl.BlockSpec((ndf2, 4 * ndf), lambda i: (0, 0)),
                pl.BlockSpec((ndf2, 1), lambda i: (0, 0)),
                pl.BlockSpec((ndf2, 1), lambda i: (0, 0)),
                pl.BlockSpec(memory_space=pltpu.MemorySpace.SMEM),   # b4 scalar
            ],
            out_specs=pl.BlockSpec((1, tm), lambda i: (0, i)),
        ),
        compiler_params=pltpu.CompilerParams(
            dimension_semantics=("parallel",),
            # Let XLA fuse the space-to-depth transpose / bf16 cast / pad into
            # the kernel operand instead of materialising xp in HBM.
            allow_input_fusion=[True] + [False] * 8,
            vmem_limit_bytes=32 * 1024 * 1024,
        ),
    )(xp, ops["w1blk"], ops["b1"], ops["w2blk"], ops["s2"],
      ops["w3cat"], ops["s3"], ops["w4"], ops["b4"])

    out = out[:, :M]
    # [1, N*H4*W4] -> [N, 1, H4, W4]; leading dim is 1 so this reshape
    # preserves (n, h4, w4) element order exactly.
    return out.reshape(N, 1, H4, W4)


# ----------------------------------------------------------------------------
# Pure-JAX reference (lax convs) for correctness checking
# ----------------------------------------------------------------------------
def _ref_forward(x, params):
    dn = ("NCHW", "OIHW", "NCHW")
    x = x.astype(jnp.float32)
    y = lax.conv_general_dilated(x, params["w1"], (1, 1), "VALID",
                                 dimension_numbers=dn)
    y = _leaky(y + params["b1"][None, :, None, None])
    y = lax.conv_general_dilated(y, params["w2"], (2, 2), "VALID",
                                 dimension_numbers=dn)
    s, sh = fold_bn(params["g2"], params["be2"], params["m2"], params["v2"])
    y = _leaky(y * s[None, :, None, None] + sh[None, :, None, None])
    y = lax.conv_general_dilated(y, params["w3"], (2, 2), "VALID",
                                 dimension_numbers=dn)
    s, sh = fold_bn(params["g3"], params["be3"], params["m3"], params["v3"])
    y = _leaky(y * s[None, :, None, None] + sh[None, :, None, None])
    y = lax.conv_general_dilated(y, params["w4"], (1, 1), "VALID",
                                 dimension_numbers=dn)
    return y + params["b4"][None, :, None, None]


# ----------------------------------------------------------------------------
# Parameter construction (deterministic, synthetic)
# ----------------------------------------------------------------------------
def init_params(key, in_ch=1, ndf=8):
    ks = jax.random.split(key, 6)
    nrm = lambda k, shape: 0.1 * jax.random.normal(k, shape, jnp.float32)
    return {
        "w1": nrm(ks[0], (ndf, in_ch, 1, 1)),      # Conv2d(in_ch, ndf, 1)
        "b1": nrm(ks[1], (ndf,)),
        "w2": nrm(ks[2], (ndf, ndf, 2, 2)),        # Conv2d(ndf, ndf, 2, 2, bias=False)
        "g2": jnp.ones((ndf,), jnp.float32),
        "be2": jnp.zeros((ndf,), jnp.float32),
        "m2": jnp.zeros((ndf,), jnp.float32),      # BN running_mean
        "v2": jnp.ones((ndf,), jnp.float32),       # BN running_var
        "w3": nrm(ks[3], (2 * ndf, ndf, 2, 2)),    # Conv2d(ndf, 2*ndf, 2, 2, bias=False)
        "g3": jnp.ones((2 * ndf,), jnp.float32),
        "be3": jnp.zeros((2 * ndf,), jnp.float32),
        "m3": jnp.zeros((2 * ndf,), jnp.float32),
        "v3": jnp.ones((2 * ndf,), jnp.float32),
        "w4": nrm(ks[4], (1, 2 * ndf, 1, 1)),      # Conv2d(2*ndf, 1, 1)
        "b4": nrm(ks[5], (1,)),
    }


# ----------------------------------------------------------------------------
if __name__ == "__main__":
    key = jax.random.PRNGKey(0)
    k_par, k_x, k_par2, k_x2 = jax.random.split(key, 4)

    # --- config A: nominal small shape, default bf16 compute ----------------
    batch, in_ch, ndf, spatial = 2, 1, 8, 16
    params = init_params(k_par, in_ch=in_ch, ndf=ndf)
    x = jax.random.normal(k_x, (batch, in_ch, spatial, spatial), jnp.float32)

    fwd_bf16 = jax.jit(discriminator2_forward)
    y = jax.block_until_ready(fwd_bf16(x, params))
    assert y.shape == (batch, 1, spatial // 4, spatial // 4), y.shape
    assert bool(jnp.all(jnp.isfinite(y)))

    y_ref = _ref_forward(x, params)
    # bf16 inputs/weights -> loose tolerance against the f32 reference.
    assert bool(jnp.allclose(y, y_ref, atol=5e-2, rtol=5e-2)), (
        float(jnp.max(jnp.abs(y - y_ref))))

    # f32 compute mode must match the reference tightly (structural check).
    fwd_f32 = jax.jit(functools.partial(discriminator2_forward,
                                        compute_dtype=jnp.float32))
    y32 = jax.block_until_ready(fwd_f32(x, params))
    assert bool(jnp.allclose(y32, y_ref, atol=1e-4, rtol=1e-4)), (
        float(jnp.max(jnp.abs(y32 - y_ref))))

    # --- config B: Cin>1, non-multiple-of-4 spatial (crop), multi-block grid
    #     with lane padding (M=578 -> tm=384, grid=2) -------------------------
    batch_b, in_ch_b, spatial_b = 2, 3, 70
    params_b = init_params(k_par2, in_ch=in_ch_b, ndf=ndf)
    x_b = jax.random.normal(k_x2, (batch_b, in_ch_b, spatial_b, spatial_b),
                            jnp.float32)
    y_b = jax.block_until_ready(fwd_f32(x_b, params_b))
    y_b_ref = _ref_forward(x_b, params_b)
    assert y_b.shape == y_b_ref.shape == (batch_b, 1, 17, 17), y_b.shape
    assert bool(jnp.allclose(y_b, y_b_ref, atol=1e-4, rtol=1e-4)), (
        float(jnp.max(jnp.abs(y_b - y_b_ref))))

    print("KERNEL_OK")
</pallas_src>

<mosaic_0001>
module attributes {stable_mosaic.version = 11 : i64} {
  func.func @_disc2_kernel(%arg0: i32, %arg1: memref<16x32xbf16, #tpu.memory_space<vmem>>, %arg2: memref<128x16xbf16, #tpu.memory_space<vmem>>, %arg3: memref<128x1xf32, #tpu.memory_space<vmem>>, %arg4: memref<32x128xbf16, #tpu.memory_space<vmem>>, %arg5: memref<32x1xf32, #tpu.memory_space<vmem>>, %arg6: memref<16x32xbf16, #tpu.memory_space<vmem>>, %arg7: memref<16x1xf32, #tpu.memory_space<vmem>>, %arg8: memref<16x1xf32, #tpu.memory_space<vmem>>, %arg9: memref<1x1xf32, #tpu.memory_space<smem>>, %arg10: memref<1x32xf32, #tpu.memory_space<vmem>>) attributes {dimension_semantics = [#tpu.dimension_semantics<parallel>], iteration_bounds = array<i64: 1>, scalar_prefetch = 0 : i64, scratch_operands = 0 : i64, tpu.core_type = #tpu.core_type<tc>, window_params = [{transform_indices = @transform_0, window_bounds = array<i64: 16, 32>}, {pipeline_mode = #tpu.pipeline_mode<synchronous>, transform_indices = @transform_1, window_bounds = array<i64: 128, 16>}, {pipeline_mode = #tpu.pipeline_mode<synchronous>, transform_indices = @transform_2, window_bounds = array<i64: 128, 1>}, {pipeline_mode = #tpu.pipeline_mode<synchronous>, transform_indices = @transform_3, window_bounds = array<i64: 32, 128>}, {pipeline_mode = #tpu.pipeline_mode<synchronous>, transform_indices = @transform_4, window_bounds = array<i64: 32, 1>}, {pipeline_mode = #tpu.pipeline_mode<synchronous>, transform_indices = @transform_5, window_bounds = array<i64: 16, 32>}, {pipeline_mode = #tpu.pipeline_mode<synchronous>, transform_indices = @transform_6, window_bounds = array<i64: 16, 1>}, {pipeline_mode = #tpu.pipeline_mode<synchronous>, transform_indices = @transform_7, window_bounds = array<i64: 16, 1>}, {transform_indices = @transform_8, window_bounds = array<i64: 1, 1>}, {transform_indices = @transform_9, window_bounds = array<i64: 1, 32>}]} {
    %c0 = arith.constant 0 : index
    %c0_0 = arith.constant 0 : index
    %0 = vector.load %arg2[%c0, %c0_0] : memref<128x16xbf16, #tpu.memory_space<vmem>>, vector<128x16xbf16>
    %c0_1 = arith.constant 0 : index
    %c0_2 = arith.constant 0 : index
    %1 = vector.load %arg1[%c0_1, %c0_2] : memref<16x32xbf16, #tpu.memory_space<vmem>>, vector<16x32xbf16>
    %cst = arith.constant dense<0.000000e+00> : vector<128x32xf32>
    %2 = tpu.matmul %0, %1, %cst {dimension_numbers = #tpu.dot_dimension_numbers<[1], [0], [0], [1], [0, 0, 1, 1], [], []>} : vector<128x16xbf16>, vector<16x32xbf16>, vector<128x32xf32> -> vector<128x32xf32>
    %c0_3 = arith.constant 0 : index
    %c0_4 = arith.constant 0 : index
    %3 = vector.load %arg3[%c0_3, %c0_4] : memref<128x1xf32, #tpu.memory_space<vmem>>, vector<128x1xf32>
    %4 = vector.broadcast %3 : vector<128x1xf32> to vector<128x32xf32>
    %5 = arith.addf %2, %4 : vector<128x32xf32>
    %cst_5 = arith.constant 2.000000e-01 : f32
    %6 = vector.broadcast %cst_5 : f32 to vector<128x32xf32>
    %7 = arith.mulf %6, %5 : vector<128x32xf32>
    %8 = arith.maximumf %5, %7 : vector<128x32xf32>
    %9 = arith.truncf %8 : vector<128x32xf32> to vector<128x32xbf16>
    %c0_6 = arith.constant 0 : index
    %c0_7 = arith.constant 0 : index
    %10 = vector.load %arg4[%c0_6, %c0_7] : memref<32x128xbf16, #tpu.memory_space<vmem>>, vector<32x128xbf16>
    %cst_8 = arith.constant dense<0.000000e+00> : vector<32x32xf32>
    %11 = tpu.matmul %10, %9, %cst_8 {dimension_numbers = #tpu.dot_dimension_numbers<[1], [0], [0], [1], [0, 0, 1, 1], [], []>} : vector<32x128xbf16>, vector<128x32xbf16>, vector<32x32xf32> -> vector<32x32xf32>
    %c0_9 = arith.constant 0 : index
    %c0_10 = arith.constant 0 : index
    %12 = vector.load %arg5[%c0_9, %c0_10] : memref<32x1xf32, #tpu.memory_space<vmem>>, vector<32x1xf32>
    %13 = vector.broadcast %12 : vector<32x1xf32> to vector<32x32xf32>
    %14 = arith.addf %11, %13 : vector<32x32xf32>
    %cst_11 = arith.constant 2.000000e-01 : f32
    %15 = vector.broadcast %cst_11 : f32 to vector<32x32xf32>
    %16 = arith.mulf %15, %14 : vector<32x32xf32>
    %17 = arith.maximumf %14, %16 : vector<32x32xf32>
    %18 = arith.truncf %17 : vector<32x32xf32> to vector<32x32xbf16>
    %c0_12 = arith.constant 0 : index
    %c0_13 = arith.constant 0 : index
    %19 = vector.load %arg6[%c0_12, %c0_13] : memref<16x32xbf16, #tpu.memory_space<vmem>>, vector<16x32xbf16>
    %cst_14 = arith.constant dense<0.000000e+00> : vector<16x32xf32>
    %20 = tpu.matmul %19, %18, %cst_14 {dimension_numbers = #tpu.dot_dimension_numbers<[1], [0], [0], [1], [0, 0, 1, 1], [], []>} : vector<16x32xbf16>, vector<32x32xbf16>, vector<16x32xf32> -> vector<16x32xf32>
    %c0_15 = arith.constant 0 : index
    %c0_16 = arith.constant 0 : index
    %21 = vector.load %arg7[%c0_15, %c0_16] : memref<16x1xf32, #tpu.memory_space<vmem>>, vector<16x1xf32>
    %22 = vector.broadcast %21 : vector<16x1xf32> to vector<16x32xf32>
    %23 = arith.addf %20, %22 : vector<16x32xf32>
    %cst_17 = arith.constant 2.000000e-01 : f32
    %24 = vector.broadcast %cst_17 : f32 to vector<16x32xf32>
    %25 = arith.mulf %24, %23 : vector<16x32xf32>
    %26 = arith.maximumf %23, %25 : vector<16x32xf32>
    %c0_18 = arith.constant 0 : index
    %c0_19 = arith.constant 0 : index
    %27 = vector.load %arg8[%c0_18, %c0_19] : memref<16x1xf32, #tpu.memory_space<vmem>>, vector<16x1xf32>
    %28 = vector.broadcast %27 : vector<16x1xf32> to vector<16x32xf32>
    %29 = arith.mulf %26, %28 : vector<16x32xf32>
    %cst_20 = arith.constant dense<0.000000e+00> : vector<32xf32>
    %30 = vector.multi_reduction <add>, %29, %cst_20 [0] : vector<16x32xf32> to vector<32xf32>
    %31 = vector.shape_cast %30 : vector<32xf32> to vector<1x32xf32>
    %c0_21 = arith.constant 0 : index
    %c0_22 = arith.constant 0 : index
    %32 = memref.load %arg9[%c0_21, %c0_22] : memref<1x1xf32, #tpu.memory_space<smem>>
    %33 = vector.broadcast %32 : f32 to vector<1x32xf32>
    %34 = arith.addf %31, %33 : vector<1x32xf32>
    %c0_23 = arith.constant 0 : index
    %c0_24 = arith.constant 0 : index
    %35 = vector.load %arg10[%c0_23, %c0_24] : memref<1x32xf32, #tpu.memory_space<vmem>>, vector<1x32xf32>
    tpu.vector_store %arg10[%c0_23, %c0_24], %34 {strides = array<i32>} : memref<1x32xf32, #tpu.memory_space<vmem>>, vector<1x32xf32>,
    return
  }
  func.func @transform_0(%arg0: i32) -> (i32, i32) {
    %c0_i32 = arith.constant 0 : i32
    %c0_i32_0 = arith.constant 0 : i32
    return %c0_i32, %arg0 : i32, i32
  }
  func.func @transform_1(%arg0: i32) -> (i32, i32) {
    %c0_i32 = arith.constant 0 : i32
    %c0_i32_0 = arith.constant 0 : i32
    %c0_i32_1 = arith.constant 0 : i32
    return %c0_i32, %c0_i32_0 : i32, i32
  }
  func.func @transform_2(%arg0: i32) -> (i32, i32) {
    %c0_i32 = arith.constant 0 : i32
    %c0_i32_0 = arith.constant 0 : i32
    %c0_i32_1 = arith.constant 0 : i32
    return %c0_i32, %c0_i32_0 : i32, i32
  }
  func.func @transform_3(%arg0: i32) -> (i32, i32) {
    %c0_i32 = arith.constant 0 : i32
    %c0_i32_0 = arith.constant 0 : i32
    %c0_i32_1 = arith.constant 0 : i32
    return %c0_i32, %c0_i32_0 : i32, i32
  }
  func.func @transform_4(%arg0: i32) -> (i32, i32) {
    %c0_i32 = arith.constant 0 : i32
    %c0_i32_0 = arith.constant 0 : i32
    %c0_i32_1 = arith.constant 0 : i32
    return %c0_i32, %c0_i32_0 : i32, i32
  }
  func.func @transform_5(%arg0: i32) -> (i32, i32) {
    %c0_i32 = arith.constant 0 : i32
    %c0_i32_0 = arith.constant 0 : i32
    %c0_i32_1 = arith.constant 0 : i32
    return %c0_i32, %c0_i32_0 : i32, i32
  }
  func.func @transform_6(%arg0: i32) -> (i32, i32) {
    %c0_i32 = arith.constant 0 : i32
    %c0_i32_0 = arith.constant 0 : i32
    %c0_i32_1 = arith.constant 0 : i32
    return %c0_i32, %c0_i32_0 : i32, i32
  }
  func.func @transform_7(%arg0: i32) -> (i32, i32) {
    %c0_i32 = arith.constant 0 : i32
    %c0_i32_0 = arith.constant 0 : i32
    %c0_i32_1 = arith.constant 0 : i32
    return %c0_i32, %c0_i32_0 : i32, i32
  }
  func.func @transform_8(%arg0: i32) -> (i32, i32) {
    %c0_i32 = arith.constant 0 : i32
    %c0_i32_0 = arith.constant 0 : i32
    %c0_i32_1 = arith.constant 0 : i32
    return %c0_i32, %c0_i32_0 : i32, i32
  }
  func.func @transform_9(%arg0: i32) -> (i32, i32) {
    %c0_i32 = arith.constant 0 : i32
    %c0_i32_0 = arith.constant 0 : i32
    return %c0_i32, %arg0 : i32, i32
  }
}

</mosaic_0001>

<llo_original>
// kernel: mul.18
$region0: #{mul.18}
  %s0 = inlined_call_operand.vmem [shape: f32[8,2,2,8], index: 0, kind: input, shape index: {}]
  %s1 = inlined_call_operand.vmem [shape: f32[8,32], index: 1, kind: output, shape index: {}]
  $region1: #{mul.18} parent=0
    #allocation0 [shape = 'u8[65536]{0}', space=vmem, size = 0x10000, scoped, tag = 'scoped mem for input reshape']
    %s3 = sshll.u32 1, 2
    %s4 = ssub.s32 %s3, 1
    %s5 = smul.addr 2, 15
    %s6 = scalar_lea.vmem %s0, %s5
    %v7 = vld [vmem:[%s6] sm:%s4]
    %s8 = scalar_lea.vmem [#allocation0], 120
    %9 = vst [vmem:[%s8] sm:%s4] %v7
    %s10 = smul.addr 2, 14
    %s11 = scalar_lea.vmem %s0, %s10
    %v12 = vld [vmem:[%s11] sm:%s4]
    %s13 = scalar_lea.vmem [#allocation0], 112
    %14 = vst [vmem:[%s13] sm:%s4] %v12
    %s15 = smul.addr 2, 13
    %s16 = scalar_lea.vmem %s0, %s15
    %v17 = vld [vmem:[%s16] sm:%s4]
    %s18 = scalar_lea.vmem [#allocation0], 104
    %19 = vst [vmem:[%s18] sm:%s4] %v17
    %s20 = smul.addr 2, 12
    %s21 = scalar_lea.vmem %s0, %s20
    %v22 = vld [vmem:[%s21] sm:%s4]
    %s23 = scalar_lea.vmem [#allocation0], 96
    %24 = vst [vmem:[%s23] sm:%s4] %v22
    %s25 = smul.addr 2, 11
    %s26 = scalar_lea.vmem %s0, %s25
    %v27 = vld [vmem:[%s26] sm:%s4]
    %s28 = scalar_lea.vmem [#allocation0], 88
    %29 = vst [vmem:[%s28] sm:%s4] %v27
    %s30 = smul.addr 2, 10
    %s31 = scalar_lea.vmem %s0, %s30
    %v32 = vld [vmem:[%s31] sm:%s4]
    %s33 = scalar_lea.vmem [#allocation0], 80
    %34 = vst [vmem:[%s33] sm:%s4] %v32
    %s35 = smul.addr 2, 9
    %s36 = scalar_lea.vmem %s0, %s35
    %v37 = vld [vmem:[%s36] sm:%s4]
    %s38 = scalar_lea.vmem [#allocation0], 72
    %39 = vst [vmem:[%s38] sm:%s4] %v37
    %s40 = smul.addr 2, 8
    %s41 = scalar_lea.vmem %s0, %s40
    %v42 = vld [vmem:[%s41] sm:%s4]
    %s43 = scalar_lea.vmem [#allocation0], 64
    %44 = vst [vmem:[%s43] sm:%s4] %v42
    %s45 = smul.addr 2, 7
    %s46 = scalar_lea.vmem %s0, %s45
    %v47 = vld [vmem:[%s46] sm:%s4]
    %s48 = scalar_lea.vmem [#allocation0], 56
    %49 = vst [vmem:[%s48] sm:%s4] %v47
    %s50 = smul.addr 2, 6
    %s51 = scalar_lea.vmem %s0, %s50
    %v52 = vld [vmem:[%s51] sm:%s4]
    %s53 = scalar_lea.vmem [#allocation0], 48
    %54 = vst [vmem:[%s53] sm:%s4] %v52
    %s55 = smul.addr 2, 5
    %s56 = scalar_lea.vmem %s0, %s55
    %v57 = vld [vmem:[%s56] sm:%s4]
    %s58 = scalar_lea.vmem [#allocation0], 40
    %59 = vst [vmem:[%s58] sm:%s4] %v57
    %s60 = smul.addr 2, 4
    %s61 = scalar_lea.vmem %s0, %s60
    %v62 = vld [vmem:[%s61] sm:%s4]
    %s63 = scalar_lea.vmem [#allocation0], 32
    %64 = vst [vmem:[%s63] sm:%s4] %v62
    %s65 = smul.addr 2, 3
    %s66 = scalar_lea.vmem %s0, %s65
    %v67 = vld [vmem:[%s66] sm:%s4]
    %s68 = scalar_lea.vmem [#allocation0], 24
    %69 = vst [vmem:[%s68] sm:%s4] %v67
    %s70 = smul.addr 2, 2
    %s71 = scalar_lea.vmem %s0, %s70
    %v72 = vld [vmem:[%s71] sm:%s4]
    %s73 = scalar_lea.vmem [#allocation0], 16
    %74 = vst [vmem:[%s73] sm:%s4] %v72
    %s75 = scalar_lea.vmem %s0, 2
    %v76 = vld [vmem:[%s75] sm:%s4]
    %s77 = scalar_lea.vmem [#allocation0], 8
    %78 = vst [vmem:[%s77] sm:%s4] %v76
    %v79 = vld [vmem:[%s0] sm:%s4]
    %80 = vst [vmem:[#allocation0] sm:%s4] %v79
    %s81 = smov 3
    %v82 = vld [vmem:[#allocation0] ss:$16 sm:%s81]
    %s83 = smov 12
    %v84 = vld [vmem:[#allocation0] ss:$16 sm:%s83]
    %vm85 = vcmask 1043458
    %v86 = vsel %vm85, %v84, %v82
    %s87 = smov 48
    %v88 = vld [vmem:[#allocation0] ss:$16 sm:%s87]
    %vm89 = vcmask 1045508
    %v90 = vsel %vm89, %v88, %v86
    %s91 = smov 192
    %v92 = vld [vmem:[#allocation0] ss:$16 sm:%s91]
    %vm93 = vcmask 1047558
    %v94 = vsel %vm93, %v92, %v90
    %vm95 = vcmask 64512
    %96 = vst.msk [vmem:[%s1] sm:$0xff] %vm95, %v94
    %s97 = scalar_lea.vmem [#allocation0], 9
    %s98 = smov 3
    %v99 = vld [vmem:[%s97] ss:$16 sm:%s98]
    %s100 = scalar_lea.vmem [#allocation0], 9
    %s101 = smov 12
    %v102 = vld [vmem:[%s100] ss:$16 sm:%s101]
    %vm103 = vcmask 1043458
    %v104 = vsel %vm103, %v102, %v99
    %s105 = scalar_lea.vmem [#allocation0], 9
    %s106 = smov 48
    %v107 = vld [vmem:[%s105] ss:$16 sm:%s106]
    %vm108 = vcmask 1045508
    %v109 = vsel %vm108, %v107, %v104
    %s110 = scalar_lea.vmem [#allocation0], 9
    %s111 = smov 192
    %v112 = vld [vmem:[%s110] ss:$16 sm:%s111]
    %vm113 = vcmask 1047558
    %v114 = vsel %vm113, %v112, %v109
    %115 = vrot.lane.b32.xlu0 %v114, 24
    %v116 = vpop.permute.xlu0 %115
    %vm117 = vcmask 261312
    %118 = vst.msk [vmem:[%s1] sm:$0xff] %vm117, %v116
    %s119 = scalar_lea.vmem [#allocation0], 8
    %s120 = smov 3
    %v121 = vld [vmem:[%s119] ss:$16 sm:%s120]
    %s122 = scalar_lea.vmem [#allocation0], 8
    %s123 = smov 12
    %v124 = vld [vmem:[%s122] ss:$16 sm:%s123]
    %vm125 = vcmask 1043458
    %v126 = vsel %vm125, %v124, %v121
    %s127 = scalar_lea.vmem [#allocation0], 8
    %s128 = smov 48
    %v129 = vld [vmem:[%s127] ss:$16 sm:%s128]
    %vm130 = vcmask 1045508
    %v131 = vsel %vm130, %v129, %v126
    %s132 = scalar_lea.vmem [#allocation0], 8
    %s133 = smov 192
    %v134 = vld [vmem:[%s132] ss:$16 sm:%s133]
    %vm135 = vcmask 1047558
    %v136 = vsel %vm135, %v134, %v131
    %137 = vrot.lane.b32.xlu0 %v136, 16
    %v138 = vpop.permute.xlu0 %137
    %vm139 = vcmask 195712
    %140 = vst.msk [vmem:[%s1] sm:$0xff] %vm139, %v138
    %s141 = scalar_lea.vmem [#allocation0], 1
    %s142 = smov 3
    %v143 = vld [vmem:[%s141] ss:$16 sm:%s142]
    %s144 = scalar_lea.vmem [#allocation0], 1
    %s145 = smov 12
    %v146 = vld [vmem:[%s144] ss:$16 sm:%s145]
    %vm147 = vcmask 1043458
    %v148 = vsel %vm147, %v146, %v143
    %s149 = scalar_lea.vmem [#allocation0], 1
    %s150 = smov 48
    %v151 = vld [vmem:[%s149] ss:$16 sm:%s150]
    %vm152 = vcmask 1045508
    %v153 = vsel %vm152, %v151, %v148
    %s154 = scalar_lea.vmem [#allocation0], 1
    %s155 = smov 192
    %v156 = vld [vmem:[%s154] ss:$16 sm:%s155]
    %vm157 = vcmask 1047558
    %v158 = vsel %vm157, %v156, %v153
    %159 = vrot.lane.b32.xlu0 %v158, 8
    %v160 = vpop.permute.xlu0 %159
    %vm161 = vcmask 130112
    %162 = vst.msk [vmem:[%s1] sm:$0xff] %vm161, %v160

// kernel: discriminator2_forward.1
$region0: #{discriminator2_forward.1}
  #allocation0 [shape = 'u32[]', space=smem, size = 0x4, offset = 0x4, fixed_abs, tag = 'smem constant byte address 0x4 - core index']
  #allocation1 [shape = 'u32[144,128]{1,0:T(1,128)}', space=vmem, size = 0x12000, scoped, tag = 'internal scratch']
  #allocation2 [shape = 'f32[1,1]{1,0:T(1,128)S(6)}', space=smem, size = 0x200, scoped, tag = 'scoped memory for discriminator2_forward.1']
  %s0 = inlined_call_operand.vmem [shape: bf16[16,32], index: 0, kind: input, shape index: {}]
  %s1 = inlined_call_operand.vmem [shape: bf16[128,16], index: 1, kind: input, shape index: {}]
  %s2 = inlined_call_operand.vmem [shape: f32[128,1], index: 2, kind: input, shape index: {}]
  %s3 = inlined_call_operand.vmem [shape: bf16[32,128], index: 3, kind: input, shape index: {}]
  %s4 = inlined_call_operand.vmem [shape: f32[32,1], index: 4, kind: input, shape index: {}]
  %s5 = inlined_call_operand.vmem [shape: bf16[16,32], index: 5, kind: input, shape index: {}]
  %s6 = inlined_call_operand.vmem [shape: f32[16,1], index: 6, kind: input, shape index: {}]
  %s7 = inlined_call_operand.vmem [shape: f32[16,1], index: 7, kind: input, shape index: {}]
  %s8 = inlined_call_operand.<no memory space> [shape: f32[1,1], index: 8, kind: input, shape index: {}]
  %s9 = inlined_call_operand.vmem [shape: f32[1,32], index: 9, kind: output, shape index: {}]
  %s10 = sld [smem:[#allocation0]]
  $region46: #{discriminator2_forward.1} parent=0
    _
  %s12 = ssub.s32 1, %s10
  %s13 = scalar_select 0, %s12, %s10
  %14 = sst [smem:[#allocation2]] %s8
  // Predicated region
  $region2: #{discriminator2_forward.1} parent=0 // pred_check
    _
  $region3: #{discriminator2_forward.1} parent=0 // pred_check_branch
    %16 = sbr.rel (0) target = $region5
  $region4: #{discriminator2_forward.1} parent=0 // pred_region
    _
  $region5: #{discriminator2_forward.1} parent=0 // pred_fallthru
    _
  // Predicated region
  $region6: #{discriminator2_forward.1} parent=0 // pred_check
    _
  $region7: #{discriminator2_forward.1} parent=0 // pred_check_branch
    %18 = sbr.rel (0) target = $region9
  $region8: #{discriminator2_forward.1} parent=0 // pred_region
    _
  $region9: #{discriminator2_forward.1} parent=0 // pred_fallthru
    _
  // Predicated region
  $region10: #{discriminator2_forward.1} parent=0 // pred_check
    _
  $region11: #{discriminator2_forward.1} parent=0 // pred_check_branch
    %20 = sbr.rel (0) target = $region13
  $region12: #{discriminator2_forward.1} parent=0 // pred_region
    _
  $region13: #{discriminator2_forward.1} parent=0 // pred_fallthru
    _
  // Predicated region
  $region14: #{discriminator2_forward.1} parent=0 // pred_check
    _
  $region15: #{discriminator2_forward.1} parent=0 // pred_check_branch
    %22 = sbr.rel (0) target = $region17
  $region16: #{discriminator2_forward.1} parent=0 // pred_region
    _
  $region17: #{discriminator2_forward.1} parent=0 // pred_fallthru
    _
  // Predicated region
  $region18: #{discriminator2_forward.1} parent=0 // pred_check
    _
  $region19: #{discriminator2_forward.1} parent=0 // pred_check_branch
    %24 = sbr.rel (0) target = $region21
  $region20: #{discriminator2_forward.1} parent=0 // pred_region
    _
  $region21: #{discriminator2_forward.1} parent=0 // pred_fallthru
    _
  // Predicated region
  $region22: #{discriminator2_forward.1} parent=0 // pred_check
    _
  $region23: #{discriminator2_forward.1} parent=0 // pred_check_branch
    %26 = sbr.rel (0) target = $region25
  $region24: #{discriminator2_forward.1} parent=0 // pred_region
    _
  $region25: #{discriminator2_forward.1} parent=0 // pred_fallthru
    _
  // Predicated region
  $region26: #{discriminator2_forward.1} parent=0 // pred_check
    _
  $region27: #{discriminator2_forward.1} parent=0 // pred_check_branch
    %28 = sbr.rel (0) target = $region29
  $region28: #{discriminator2_forward.1} parent=0 // pred_region
    _
  $region29: #{discriminator2_forward.1} parent=0 // pred_fallthru
    _
  // Predicated region
  $region30: #{discriminator2_forward.1} parent=0 // pred_check
    _
  $region31: #{discriminator2_forward.1} parent=0 // pred_check_branch
    %30 = sbr.rel (0) target = $region33
  $region32: #{discriminator2_forward.1} parent=0 // pred_region
    _
  $region33: #{discriminator2_forward.1} parent=0 // pred_fallthru
    _
  // Predicated region
  $region34: #{discriminator2_forward.1} parent=0 // pred_check
    _
  $region35: #{discriminator2_forward.1} parent=0 // pred_check_branch
    %32 = sbr.rel (0) target = $region37
  $region36: #{discriminator2_forward.1} parent=0 // pred_region
    _
  $region37: #{discriminator2_forward.1} parent=0 // pred_fallthru
    _
  %v34 = vld [vmem:[%s1] sm:$0xf]
  %v35 = vld [vmem:[%s1 + $0x4] sm:$0xf]
  %v36 = vld [vmem:[%s1 + $0x8] sm:$0xf]
  %v37 = vld [vmem:[%s1 + $0xc] sm:$0xf]
  %v38 = vld [vmem:[%s1 + $0x10] sm:$0xf]
  %v39 = vld [vmem:[%s1 + $0x14] sm:$0xf]
  %v40 = vld [vmem:[%s1 + $0x18] sm:$0xf]
  %v41 = vld [vmem:[%s1 + $0x1c] sm:$0xf]
  %v42 = vld [vmem:[%s1 + $0x20] sm:$0xf]
  %v43 = vld [vmem:[%s1 + $0x24] sm:$0xf]
  %v44 = vld [vmem:[%s1 + $0x28] sm:$0xf]
  %v45 = vld [vmem:[%s1 + $0x2c] sm:$0xf]
  %v46 = vld [vmem:[%s1 + $0x30] sm:$0xf]
  %v47 = vld [vmem:[%s1 + $0x34] sm:$0xf]
  %v48 = vld [vmem:[%s1 + $0x38] sm:$0xf]
  %v49 = vld [vmem:[%s1 + $0x3c] sm:$0xf]
  %v50 = vld [vmem:[%s0] sm:$0xf]
  %v51 = vld [vmem:[%s0 + $0x4] sm:$0xf]
  %v52 = vld [vmem:[%s2] sm:$0xff]
  %v53 = vld [vmem:[%s2 + $0x8] sm:$0xff]
  %v54 = vld [vmem:[%s2 + $0x10] sm:$0xff]
  %v55 = vld [vmem:[%s2 + $0x18] sm:$0xff]
  %v56 = vld [vmem:[%s2 + $0x20] sm:$0xff]
  %v57 = vld [vmem:[%s2 + $0x28] sm:$0xff]
  %v58 = vld [vmem:[%s2 + $0x30] sm:$0xff]
  %v59 = vld [vmem:[%s2 + $0x38] sm:$0xff]
  %v60 = vld [vmem:[%s2 + $0x40] sm:$0xff]
  %v61 = vld [vmem:[%s2 + $0x48] sm:$0xff]
  %v62 = vld [vmem:[%s2 + $0x50] sm:$0xff]
  %v63 = vld [vmem:[%s2 + $0x58] sm:$0xff]
  %v64 = vld [vmem:[%s2 + $0x60] sm:$0xff]
  %v65 = vld [vmem:[%s2 + $0x68] sm:$0xff]
  %v66 = vld [vmem:[%s2 + $0x70] sm:$0xff]
  %v67 = vld [vmem:[%s2 + $0x78] sm:$0xff]
  %69 = vset.pattern.permute.xlu0 0
  %70 = vperm.xlu0 %69, %v52
  %v71 = vpop.permute.xlu0 %70
  %74 = vset.pattern.permute.xlu0 0
  %75 = vperm.xlu0 %74, %v53
  %v76 = vpop.permute.xlu0 %75
  %79 = vset.pattern.permute.xlu0 0
  %80 = vperm.xlu0 %79, %v54
  %v81 = vpop.permute.xlu0 %80
  %84 = vset.pattern.permute.xlu0 0
  %85 = vperm.xlu0 %84, %v55
  %v86 = vpop.permute.xlu0 %85
  %89 = vset.pattern.permute.xlu0 0
  %90 = vperm.xlu0 %89, %v56
  %v91 = vpop.permute.xlu0 %90
  %94 = vset.pattern.permute.xlu0 0
  %95 = vperm.xlu0 %94, %v57
  %v96 = vpop.permute.xlu0 %95
  %99 = vset.pattern.permute.xlu0 0
  %100 = vperm.xlu0 %99, %v58
  %v101 = vpop.permute.xlu0 %100
  %104 = vset.pattern.permute.xlu0 0
  %105 = vperm.xlu0 %104, %v59
  %v106 = vpop.permute.xlu0 %105
  %109 = vset.pattern.permute.xlu0 0
  %110 = vperm.xlu0 %109, %v60
  %v111 = vpop.permute.xlu0 %110
  %114 = vset.pattern.permute.xlu0 0
  %115 = vperm.xlu0 %114, %v61
  %v116 = vpop.permute.xlu0 %115
  %119 = vset.pattern.permute.xlu0 0
  %120 = vperm.xlu0 %119, %v62
  %v121 = vpop.permute.xlu0 %120
  %124 = vset.pattern.permute.xlu0 0
  %125 = vperm.xlu0 %124, %v63
  %v126 = vpop.permute.xlu0 %125
  %129 = vset.pattern.permute.xlu0 0
  %130 = vperm.xlu0 %129, %v64
  %v131 = vpop.permute.xlu0 %130
  %134 = vset.pattern.permute.xlu0 0
  %135 = vperm.xlu0 %134, %v65
  %v136 = vpop.permute.xlu0 %135
  %139 = vset.pattern.permute.xlu0 0
  %140 = vperm.xlu0 %139, %v66
  %v141 = vpop.permute.xlu0 %140
  %144 = vset.pattern.permute.xlu0 0
  %145 = vperm.xlu0 %144, %v67
  %v146 = vpop.permute.xlu0 %145
  %v164 = vunpack.c.l.b16 %v34
  %v165 = vunpack.c.l.b16 %v35
  %v166 = vunpack.c.l.b16 %v36
  %v167 = vunpack.c.l.b16 %v37
  %v168 = vunpack.c.l.b16 %v38
  %v169 = vunpack.c.l.b16 %v39
  %v170 = vunpack.c.l.b16 %v40
  %v171 = vunpack.c.l.b16 %v41
  %v172 = vunpack.c.l.b16 %v42
  %v173 = vunpack.c.l.b16 %v43
  %v174 = vunpack.c.l.b16 %v44
  %v175 = vunpack.c.l.b16 %v45
  %v176 = vunpack.c.l.b16 %v46
  %v177 = vunpack.c.l.b16 %v47
  %v178 = vunpack.c.l.b16 %v48
  %v179 = vunpack.c.l.b16 %v49
  %v180 = vpack.c.b16 %v165, %v164
  %v181 = vpack.c.b16 %v167, %v166
  %v182 = vpack.c.b16 %v169, %v168
  %v183 = vpack.c.b16 %v171, %v170
  %v184 = vpack.c.b16 %v173, %v172
  %v185 = vpack.c.b16 %v175, %v174
  %v186 = vpack.c.b16 %v177, %v176
  %v187 = vpack.c.b16 %v179, %v178
  %v190 = vunpack.c.l.b16 %v50
  %v191 = vunpack.c.l.b16 %v51
  %v192 = vpack.c.b16 %v191, %v190
  %vm194 = vcmask 130048
  %v196 = vsel %vm194, %v180, 0
  %v199 = vsel %vm194, %v181, 0
  %v202 = vsel %vm194, %v182, 0
  %v205 = vsel %vm194, %v183, 0
  %v208 = vsel %vm194, %v184, 0
  %v211 = vsel %vm194, %v185, 0
  %v214 = vsel %vm194, %v186, 0
  %v217 = vsel %vm194, %v187, 0
  %219 = vmatprep.subr.bf16.mxu0 0
  %220 = vmatpush1.bf16.msra.mxu0 0
  %221 = vmatprep.subr.bf16.mxu0 0
  %222 = vmatpush1.bf16.msra.mxu0 0
  %223 = vmatprep.subr.bf16.mxu0 0
  %224 = vmatpush1.bf16.msra.mxu0 0
  %225 = vmatprep.subr.bf16.mxu0 0
  %226 = vmatpush1.bf16.msra.mxu0 0
  %227 = vmatprep.subr.bf16.mxu0 0
  %228 = vmatpush1.bf16.msra.mxu0 0
  %229 = vmatprep.subr.bf16.mxu0 0
  %230 = vmatpush1.bf16.msra.mxu0 0
  %231 = vmatprep.subr.bf16.mxu0 0
  %232 = vmatpush1.bf16.msra.mxu0 0
  %233 = vmatprep.subr.bf16.mxu0 0
  %234 = vmatpush1.bf16.msra.mxu0 %v192
  %235 = vmatprep.subr.bf16.mxu0 0
  %236 = vmatpush2.bf16.msra.mxu0 0
  %237 = vmatprep.subr.bf16.mxu0 0
  %238 = vmatpush2.bf16.msra.mxu0 0
  %239 = vmatprep.subr.bf16.mxu0 0
  %240 = vmatpush2.bf16.msra.mxu0 0
  %241 = vmatprep.subr.bf16.mxu0 0
  %242 = vmatpush2.bf16.msra.mxu0 0
  %243 = vmatprep.subr.bf16.mxu0 0
  %244 = vmatpush2.bf16.msra.mxu0 0
  %245 = vmatprep.subr.bf16.mxu0 0
  %246 = vmatpush2.bf16.msra.mxu0 0
  %247 = vmatprep.subr.bf16.mxu0 0
  %248 = vmatpush2.bf16.msra.mxu0 0
  %249 = vmatprep.subr.bf16.mxu0 0
  %250 = vmatpush2.bf16.msra.mxu0 0
  %251 = vmatprep.mubr.bf16.mxu0 0
  %252 = vmatmul.mubr.bf16.gmra.mxu0 %v196
  %v253 = vpop.f32.mrf.mxu0
  %v254 = vadd.f32 %v71, %v253
  %v255 = vpop.f32.mrf.mxu0
  %v256 = vpop.f32.mrf.mxu0
  %v257 = vadd.f32 %v76, %v256
  %v258 = vpop.f32.mrf.mxu0
  %259 = vmatprep.mubr.bf16.mxu0 0
  %260 = vmatmul.mubr.bf16.gmra.mxu0 %v199
  %v261 = vpop.f32.mrf.mxu0
  %v262 = vadd.f32 %v81, %v261
  %v263 = vpop.f32.mrf.mxu0
  %v264 = vpop.f32.mrf.mxu0
  %v265 = vadd.f32 %v86, %v264
  %v266 = vpop.f32.mrf.mxu0
  %267 = vmatprep.mubr.bf16.mxu0 0
  %268 = vmatmul.mubr.bf16.gmra.mxu0 %v202
  %v269 = vpop.f32.mrf.mxu0
  %v270 = vadd.f32 %v91, %v269
  %v271 = vpop.f32.mrf.mxu0
  %v272 = vpop.f32.mrf.mxu0
  %v273 = vadd.f32 %v96, %v272
  %v274 = vpop.f32.mrf.mxu0
  %275 = vmatprep.mubr.bf16.mxu0 0
  %276 = vmatmul.mubr.bf16.gmra.mxu0 %v205
  %v277 = vpop.f32.mrf.mxu0
  %v278 = vadd.f32 %v101, %v277
  %v279 = vpop.f32.mrf.mxu0
  %v280 = vpop.f32.mrf.mxu0
  %v281 = vadd.f32 %v106, %v280
  %v282 = vpop.f32.mrf.mxu0
  %283 = vmatprep.mubr.bf16.mxu0 0
  %284 = vmatmul.mubr.bf16.gmra.mxu0 %v208
  %v285 = vpop.f32.mrf.mxu0
  %v286 = vadd.f32 %v111, %v285
  %v287 = vpop.f32.mrf.mxu0
  %v288 = vpop.f32.mrf.mxu0
  %v289 = vadd.f32 %v116, %v288
  %v290 = vpop.f32.mrf.mxu0
  %291 = vmatprep.mubr.bf16.mxu0 0
  %292 = vmatmul.mubr.bf16.gmra.mxu0 %v211
  %v293 = vpop.f32.mrf.mxu0
  %v294 = vadd.f32 %v121, %v293
  %v295 = vpop.f32.mrf.mxu0
  %v296 = vpop.f32.mrf.mxu0
  %v297 = vadd.f32 %v126, %v296
  %v298 = vpop.f32.mrf.mxu0
  %299 = vmatprep.mubr.bf16.mxu0 0
  %300 = vmatmul.mubr.bf16.gmra.mxu0 %v214
  %v301 = vpop.f32.mrf.mxu0
  %v302 = vadd.f32 %v131, %v301
  %v303 = vpop.f32.mrf.mxu0
  %v304 = vpop.f32.mrf.mxu0
  %v305 = vadd.f32 %v136, %v304
  %v306 = vpop.f32.mrf.mxu0
  %307 = vmatprep.mubr.bf16.mxu0 0
  %308 = vmatmul.mubr.bf16.gmra.mxu0 %v217
  %v309 = vpop.f32.mrf.mxu0
  %v310 = vadd.f32 %v141, %v309
  %v311 = vpop.f32.mrf.mxu0
  %v312 = vpop.f32.mrf.mxu0
  %v313 = vadd.f32 %v146, %v312
  %v314 = vpop.f32.mrf.mxu0
  %315 = vdwg.mxu0
  %v316 = vmul.f32 %v254, 0.2
  %v317 = vmul.f32 %v257, 0.2
  %v318 = vmul.f32 %v262, 0.2
  %v319 = vmul.f32 %v265, 0.2
  %v320 = vmul.f32 %v270, 0.2
  %v321 = vmul.f32 %v273, 0.2
  %v322 = vmul.f32 %v278, 0.2
  %v323 = vmul.f32 %v281, 0.2
  %v324 = vmul.f32 %v286, 0.2
  %v325 = vmul.f32 %v289, 0.2
  %v326 = vmul.f32 %v294, 0.2
  %v327 = vmul.f32 %v297, 0.2
  %v328 = vmul.f32 %v302, 0.2
  %v329 = vmul.f32 %v305, 0.2
  %v330 = vmul.f32 %v310, 0.2
  %v331 = vmul.f32 %v313, 0.2
  %v332 = vmax.f32 %v254, %v316
  %v333 = vmax.f32 %v257, %v317
  %v334 = vmax.f32 %v262, %v318
  %v335 = vmax.f32 %v265, %v319
  %v336 = vmax.f32 %v270, %v320
  %v337 = vmax.f32 %v273, %v321
  %v338 = vmax.f32 %v278, %v322
  %v339 = vmax.f32 %v281, %v323
  %v340 = vmax.f32 %v286, %v324
  %v341 = vmax.f32 %v289, %v325
  %v342 = vmax.f32 %v294, %v326
  %v343 = vmax.f32 %v297, %v327
  %v344 = vmax.f32 %v302, %v328
  %v345 = vmax.f32 %v305, %v329
  %v346 = vmax.f32 %v310, %v330
  %v347 = vmax.f32 %v313, %v331
  %v348 = vpack.c.bf16 %v333, %v332
  %v349 = vpack.c.bf16 %v335, %v334
  %v350 = vpack.c.bf16 %v337, %v336
  %v351 = vpack.c.bf16 %v339, %v338
  %v352 = vpack.c.bf16 %v341, %v340
  %v353 = vpack.c.bf16 %v343, %v342
  %v354 = vpack.c.bf16 %v345, %v344
  %v355 = vpack.c.bf16 %v347, %v346
  %v356 = vld [vmem:[%s3] sm:$0xf]
  %v357 = vld [vmem:[%s3 + $0x4] sm:$0xf]
  %v358 = vld [vmem:[%s3 + $0x8] sm:$0xf]
  %v359 = vld [vmem:[%s3 + $0xc] sm:$0xf]
  %v360 = vld [vmem:[%s4] sm:$0xff]
  %v361 = vld [vmem:[%s4 + $0x8] sm:$0xff]
  %v362 = vld [vmem:[%s4 + $0x10] sm:$0xff]
  %v363 = vld [vmem:[%s4 + $0x18] sm:$0xff]
  %365 = vset.pattern.permute.xlu0 0
  %366 = vperm.xlu0 %365, %v360
  %v367 = vpop.permute.xlu0 %366
  %370 = vset.pattern.permute.xlu0 0
  %371 = vperm.xlu0 %370, %v361
  %v372 = vpop.permute.xlu0 %371
  %375 = vset.pattern.permute.xlu0 0
  %376 = vperm.xlu0 %375, %v362
  %v377 = vpop.permute.xlu0 %376
  %380 = vset.pattern.permute.xlu0 0
  %381 = vperm.xlu0 %380, %v363
  %v382 = vpop.permute.xlu0 %381
  %v388 = vunpack.c.l.b16 %v356
  %v389 = vunpack.c.l.b16 %v357
  %v390 = vunpack.c.l.b16 %v358
  %v391 = vunpack.c.l.b16 %v359
  %v392 = vpack.c.b16 %v389, %v388
  %v393 = vpack.c.b16 %v391, %v390
  %396 = vmatprep.subr.bf16.mxu0 0
  %397 = vmatpush1.bf16.msra.mxu0 %v355
  %398 = vmatprep.subr.bf16.mxu0 0
  %399 = vmatpush1.bf16.msra.mxu0 %v354
  %400 = vmatprep.subr.bf16.mxu0 0
  %401 = vmatpush1.bf16.msra.mxu0 %v353
  %402 = vmatprep.subr.bf16.mxu0 0
  %403 = vmatpush1.bf16.msra.mxu0 %v352
  %404 = vmatprep.subr.bf16.mxu0 0
  %405 = vmatpush1.bf16.msra.mxu0 %v351
  %406 = vmatprep.subr.bf16.mxu0 0
  %407 = vmatpush1.bf16.msra.mxu0 %v350
  %408 = vmatprep.subr.bf16.mxu0 0
  %409 = vmatpush1.bf16.msra.mxu0 %v349
  %410 = vmatprep.subr.bf16.mxu0 0
  %411 = vmatpush1.bf16.msra.mxu0 %v348
  %412 = vmatprep.subr.bf16.mxu0 0
  %413 = vmatpush2.bf16.msra.mxu0 0
  %414 = vmatprep.subr.bf16.mxu0 0
  %415 = vmatpush2.bf16.msra.mxu0 0
  %416 = vmatprep.subr.bf16.mxu0 0
  %417 = vmatpush2.bf16.msra.mxu0 0
  %418 = vmatprep.subr.bf16.mxu0 0
  %419 = vmatpush2.bf16.msra.mxu0 0
  %420 = vmatprep.subr.bf16.mxu0 0
  %421 = vmatpush2.bf16.msra.mxu0 0
  %422 = vmatprep.subr.bf16.mxu0 0
  %423 = vmatpush2.bf16.msra.mxu0 0
  %424 = vmatprep.subr.bf16.mxu0 0
  %425 = vmatpush2.bf16.msra.mxu0 0
  %426 = vmatprep.subr.bf16.mxu0 0
  %427 = vmatpush2.bf16.msra.mxu0 0
  %428 = vmatprep.mubr.bf16.mxu0 0
  %429 = vmatmul.mubr.bf16.gmra.mxu0 %v392
  %v430 = vpop.f32.mrf.mxu0
  %v431 = vadd.f32 %v367, %v430
  %v432 = vpop.f32.mrf.mxu0
  %v433 = vpop.f32.mrf.mxu0
  %v434 = vadd.f32 %v372, %v433
  %v435 = vpop.f32.mrf.mxu0
  %436 = vmatprep.mubr.bf16.mxu0 0
  %437 = vmatmul.mubr.bf16.gmra.mxu0 %v393
  %v438 = vpop.f32.mrf.mxu0
  %v439 = vadd.f32 %v377, %v438
  %v440 = vpop.f32.mrf.mxu0
  %v441 = vpop.f32.mrf.mxu0
  %v442 = vadd.f32 %v382, %v441
  %v443 = vpop.f32.mrf.mxu0
  %444 = vdwg.mxu0
  %v445 = vmul.f32 %v431, 0.2
  %v446 = vmul.f32 %v434, 0.2
  %v447 = vmul.f32 %v439, 0.2
  %v448 = vmul.f32 %v442, 0.2
  %v449 = vmax.f32 %v431, %v445
  %v450 = vmax.f32 %v434, %v446
  %v451 = vmax.f32 %v439, %v447
  %v452 = vmax.f32 %v442, %v448
  %v453 = vpack.c.bf16 %v450, %v449
  %v454 = vpack.c.bf16 %v452, %v451
  %v455 = vld [vmem:[%s5] sm:$0xf]
  %v456 = vld [vmem:[%s5 + $0x4] sm:$0xf]
  %v457 = vld [vmem:[%s6] sm:$0xff]
  %v458 = vld [vmem:[%s6 + $0x8] sm:$0xff]
  %460 = vset.pattern.permute.xlu0 0
  %461 = vperm.xlu0 %460, %v457
  %v462 = vpop.permute.xlu0 %461
  %465 = vset.pattern.permute.xlu0 0
  %466 = vperm.xlu0 %465, %v458
  %v467 = vpop.permute.xlu0 %466
  %v471 = vunpack.c.l.b16 %v455
  %v472 = vunpack.c.l.b16 %v456
  %v473 = vpack.c.b16 %v472, %v471
  %vm474 = vcmask 261120
  %v476 = vsel %vm474, %v473, 0
  %478 = vmatprep.subr.bf16.mxu0 0
  %479 = vmatpush1.bf16.msra.mxu0 0
  %480 = vmatprep.subr.bf16.mxu0 0
  %481 = vmatpush1.bf16.msra.mxu0 0
  %482 = vmatprep.subr.bf16.mxu0 0
  %483 = vmatpush1.bf16.msra.mxu0 0
  %484 = vmatprep.subr.bf16.mxu0 0
  %485 = vmatpush1.bf16.msra.mxu0 0
  %486 = vmatprep.subr.bf16.mxu0 0
  %487 = vmatpush1.bf16.msra.mxu0 0
  %488 = vmatprep.subr.bf16.mxu0 0
  %489 = vmatpush1.bf16.msra.mxu0 0
  %490 = vmatprep.subr.bf16.mxu0 0
  %491 = vmatpush1.bf16.msra.mxu0 %v454
  %492 = vmatprep.subr.bf16.mxu0 0
  %493 = vmatpush1.bf16.msra.mxu0 %v453
  %494 = vmatprep.subr.bf16.mxu0 0
  %495 = vmatpush2.bf16.msra.mxu0 0
  %496 = vmatprep.subr.bf16.mxu0 0
  %497 = vmatpush2.bf16.msra.mxu0 0
  %498 = vmatprep.subr.bf16.mxu0 0
  %499 = vmatpush2.bf16.msra.mxu0 0
  %500 = vmatprep.subr.bf16.mxu0 0
  %501 = vmatpush2.bf16.msra.mxu0 0
  %502 = vmatprep.subr.bf16.mxu0 0
  %503 = vmatpush2.bf16.msra.mxu0 0
  %504 = vmatprep.subr.bf16.mxu0 0
  %505 = vmatpush2.bf16.msra.mxu0 0
  %506 = vmatprep.subr.bf16.mxu0 0
  %507 = vmatpush2.bf16.msra.mxu0 0
  %508 = vmatprep.subr.bf16.mxu0 0
  %509 = vmatpush2.bf16.msra.mxu0 0
  %510 = vmatprep.mubr.bf16.mxu0 0
  %511 = vmatmul.mubr.bf16.gmra.mxu0 %v476
  %v512 = vpop.f32.mrf.mxu0
  %v513 = vadd.f32 %v462, %v512
  %v514 = vpop.f32.mrf.mxu0
  %v515 = vpop.f32.mrf.mxu0
  %v516 = vadd.f32 %v467, %v515
  %v517 = vpop.f32.mrf.mxu0
  %518 = vdwg.mxu0
  %v519 = vmul.f32 %v513, 0.2
  %v520 = vmul.f32 %v516, 0.2
  %v521 = vmax.f32 %v513, %v519
  %v522 = vmax.f32 %v516, %v520
  %v523 = vld [vmem:[%s7] sm:$0xff]
  %v524 = vld [vmem:[%s7 + $0x8] sm:$0xff]
  %526 = vset.pattern.permute.xlu0 0
  %527 = vperm.xlu0 %526, %v523
  %v528 = vpop.permute.xlu0 %527
  %531 = vset.pattern.permute.xlu0 0
  %532 = vperm.xlu0 %531, %v524
  %v533 = vpop.permute.xlu0 %532
  %v535 = vmul.f32 %v521, %v528
  %v536 = vmul.f32 %v522, %v533
  %v537 = vsel %vm474, %v535, 0.0
  %v538 = vsel %vm474, %v536, 0.0
  %v539 = vadd.f32 %v537, %v538
  %v540 = vrot.slane %v539, 4
  %v541 = vadd.f32 %v539, %v540
  %v542 = vrot.slane %v541, 2
  %v543 = vadd.f32 %v541, %v542
  %v544 = vrot.slane %v543, 1
  %v545 = vadd.f32 %v543, %v544
  %s546 = sld [smem:[#allocation2]]
  %v547 = vstv %s546
  %v548 = vadd.f32 %v545, %v547
  %vm549 = vcmask 253952
  %550 = vst.msk [vmem:[%s9] sm:$0x1] %vm549, %v548
  // Predicated region
  $region38: #{discriminator2_forward.1} parent=0 // pred_check
    _
  $region39: #{discriminator2_forward.1} parent=0 // pred_check_branch
    %552 = sbr.rel (0) target = $region41
  $region40: #{discriminator2_forward.1} parent=0 // pred_region
    _
  $region41: #{discriminator2_forward.1} parent=0 // pred_fallthru
    _
  // Predicated region
  $region42: #{discriminator2_forward.1} parent=0 // pred_check
    _
  $region43: #{discriminator2_forward.1} parent=0 // pred_check_branch
    %554 = sbr.rel (0) target = $region45
  $region44: #{discriminator2_forward.1} parent=0 // pred_region
    _
  $region45: #{discriminator2_forward.1} parent=0 // pred_fallthru
    _

</llo_original>
